<compile_context>
chip_gen: v6e
topology: v6e:2x2x1
jax: 0.10.0
libtpu: 0.0.40
codegen_flags: <defaults>
</compile_context>

<pallas_src>
import jax
import jax.numpy as jnp
import numpy as np
from jax.experimental import pallas as pl
from jax.experimental.pallas import tpu as pltpu


def make_fixed_positional_encoding(embedding_dim: int, max_length: int = 5000) -> jnp.ndarray:
    """Deterministic buffer construction, identical math to the PyTorch __init__."""
    pe = np.zeros((max_length, embedding_dim), dtype=np.float32)
    position = np.arange(0, max_length, dtype=np.float32)[:, None]            # (L, 1)
    div_term = np.exp(
        np.arange(0, embedding_dim, 2, dtype=np.float32)
        * (-np.log(10000.0) / embedding_dim)
    )                                                                          # (D/2,)
    pe[:, 0::2] = np.sin(position * div_term)
    pe[:, 1::2] = np.cos(position * div_term)
    return jnp.asarray(pe[:, None, :])                                         # (L, 1, D)


def _pe_add_kernel(x_ref, pe_ref, o_ref):
    # x_ref / o_ref: (tile_s, B*D) lane-dense slab; pe_ref: (tile_s, D), x.dtype.
    d = pe_ref.shape[-1]
    b = x_ref.shape[-1] // d
    pe = pe_ref[...]
    if b == 1:
        o_ref[...] = x_ref[...] + pe
    elif d % 128 == 0:
        # Lane-aligned D: b full-width unmasked slices, no relayout needed.
        for bi in range(b):
            sl = slice(bi * d, (bi + 1) * d)
            o_ref[:, sl] = x_ref[:, sl] + pe
    else:
        # Unaligned D: build the full-lane-width pe once per tile (lane concat is
        # XLU/VPU filler under the HBM roofline) and issue ONE full-width add +
        # store instead of b lane-shifted / masked partial stores.
        pe_full = jnp.concatenate([pe] * b, axis=-1)                           # (tile_s, B*D)
        o_ref[...] = x_ref[...] + pe_full


def _choose_tile_s(S: int, B: int, D: int, itemsize: int,
                   budget_bytes: int = 14 * 1024 * 1024,
                   min_grid_steps: int = 4) -> int:
    lane_bytes = B * D * itemsize
    # Double-buffered x-in + out tiles (B*D wide, x dtype) + double-buffered pe tile.
    per_row = 2 * lane_bytes + 2 * lane_bytes + 2 * (D * itemsize)
    tile_budget = max(8, budget_bytes // per_row)
    if S <= 8:
        return S                                   # full-extent block is always legal
    if S >= 8 * min_grid_steps:
        # Cap the tile so the grid has >= min_grid_steps steps: keeps input-DMA /
        # add / output-DMA streaming (no single-block serialization) and gives the
        # "parallel" S axis steps to shard across v7x's two TensorCores.
        cap = max(8, (pl.cdiv(S, min_grid_steps) // 8) * 8)
    else:
        cap = S
    tile_s = max(8, (min(tile_budget, cap) // 8) * 8)
    # Prefer a divisor of S (no ragged last block), but only within a bounded
    # search (never below tile_s // 2); otherwise accept the ragged last block —
    # the cdiv grid handles it and it is far cheaper than tiny tiles everywhere.
    floor = max(8, tile_s // 2)
    t = tile_s
    while t > floor and S % t != 0:
        t -= 8
    if S % t == 0:
        return t
    return tile_s


def fixed_positional_encoding_forward(x: jnp.ndarray, pe: jnp.ndarray) -> jnp.ndarray:
    """PyTorch forward: x + pe[:x.shape[0]].  x: (S, B, D); pe: (max_length, 1, D) f32."""
    S, B, D = x.shape
    pe_slice = pe[:S]                              # (S, 1, D)
    itemsize = jnp.dtype(x.dtype).itemsize

    # Fast path: KB-scale inputs — kernel dispatch + per-step overhead dominates
    # and tiny lane widths force masked stores; let XLA fuse the add.
    if x.size * itemsize < (1 << 20):
        return x + pe_slice.astype(x.dtype)

    # pe pre-cast to x.dtype halves pe DMA bytes for bf16/fp16 inputs.
    # (For sub-f32 x the add is done at x's precision; PyTorch would promote to f32.)
    pe2d = pe_slice[:, 0, :].astype(x.dtype)       # (S, D)
    x2d = x.reshape(S, B * D)                      # free contiguous view, lane axis = B*D

    tile_s = _choose_tile_s(S, B, D, itemsize)
    grid = (pl.cdiv(S, tile_s),)

    out2d = pl.pallas_call(
        _pe_add_kernel,
        out_shape=jax.ShapeDtypeStruct((S, B * D), x.dtype),
        grid_spec=pltpu.PrefetchScalarGridSpec(
            num_scalar_prefetch=0,
            grid=grid,
            in_specs=[
                pl.BlockSpec((tile_s, B * D), lambda i: (i, 0)),
                pl.BlockSpec((tile_s, D), lambda i: (i, 0)),
            ],
            out_specs=pl.BlockSpec((tile_s, B * D), lambda i: (i, 0)),
        ),
        compiler_params=pltpu.CompilerParams(
            dimension_semantics=("parallel",),     # shard S-tiles across TCs (v7x megacore)
            vmem_limit_bytes=32 * 1024 * 1024,     # buffers budgeted to ~14 MiB, ample headroom
        ),
        # TODO(synk): pass input_output_aliases={0: 0} when callers donate x so the
        # output reuses x's HBM buffer (capacity win for long sequences).
    )(x2d, pe2d)
    return out2d.reshape(S, B, D)


if __name__ == "__main__":
    max_length = 5000
    key = jax.random.PRNGKey(0)
    k1, k2, k3 = jax.random.split(key, 3)

    # Small shape implied by the module's forward (seq_len, batch, embedding_dim):
    # 2 KiB -> plain-XLA fast path.
    S, B, D = 8, 2, 32
    x = jax.random.normal(k1, (S, B, D), dtype=jnp.float32)
    pe = make_fixed_positional_encoding(D, max_length)
    out = jax.block_until_ready(fixed_positional_encoding_forward(x, pe))
    np.testing.assert_allclose(np.asarray(out), np.asarray(x + pe[:S]), rtol=1e-6, atol=1e-6)

    # Kernel path, D a multiple of 128: tile_s=256 -> grid (4,), lane-aligned unmasked stores,
    # double-buffered DMAs, megacore-shardable S axis.
    S2, B2, D2 = 1024, 4, 128
    x2 = jax.random.normal(k2, (S2, B2, D2), dtype=jnp.float32)
    pe2 = make_fixed_positional_encoding(D2, max_length)
    out2 = jax.block_until_ready(fixed_positional_encoding_forward(x2, pe2))
    np.testing.assert_allclose(np.asarray(out2), np.asarray(x2 + pe2[:S2]), rtol=1e-6, atol=1e-6)

    # Kernel path, D NOT a multiple of 128: exercises the full-lane-width pe concat
    # (single full-width store per tile instead of per-batch masked partial stores).
    S3, B3, D3 = 2048, 2, 96
    x3 = jax.random.normal(k3, (S3, B3, D3), dtype=jnp.float32)
    pe3 = make_fixed_positional_encoding(D3, max_length)
    out3 = jax.block_until_ready(fixed_positional_encoding_forward(x3, pe3))
    np.testing.assert_allclose(np.asarray(out3), np.asarray(x3 + pe3[:S3]), rtol=1e-6, atol=1e-6)

    print("KERNEL_OK")
</pallas_src>

<mosaic_0001>
module attributes {stable_mosaic.version = 11 : i64} {
  func.func @_pe_add_kernel(%arg0: i32, %arg1: memref<256x512xf32, #tpu.memory_space<vmem>>, %arg2: memref<256x128xf32, #tpu.memory_space<vmem>>, %arg3: memref<256x512xf32, #tpu.memory_space<vmem>>) attributes {dimension_semantics = [#tpu.dimension_semantics<parallel>], iteration_bounds = array<i64: 4>, scalar_prefetch = 0 : i64, scratch_operands = 0 : i64, tpu.core_type = #tpu.core_type<tc>, window_params = [{transform_indices = @transform_0, window_bounds = array<i64: 256, 512>}, {transform_indices = @transform_1, window_bounds = array<i64: 256, 128>}, {transform_indices = @transform_2, window_bounds = array<i64: 256, 512>}]} {
    %c0 = arith.constant 0 : index
    %c0_0 = arith.constant 0 : index
    %0 = vector.load %arg2[%c0, %c0_0] : memref<256x128xf32, #tpu.memory_space<vmem>>, vector<256x128xf32>
    %c0_1 = arith.constant 0 : index
    %c0_2 = arith.constant 0 : index
    %1 = vector.load %arg1[%c0_1, %c0_2] : memref<256x512xf32, #tpu.memory_space<vmem>>, vector<256x128xf32>
    %2 = arith.addf %1, %0 : vector<256x128xf32>
    %c0_3 = arith.constant 0 : index
    %c0_4 = arith.constant 0 : index
    %3 = vector.load %arg3[%c0_3, %c0_4] : memref<256x512xf32, #tpu.memory_space<vmem>>, vector<256x128xf32>
    tpu.vector_store %arg3[%c0_3, %c0_4], %2 {strides = array<i32>} : memref<256x512xf32, #tpu.memory_space<vmem>>, vector<256x128xf32>,
    %c0_5 = arith.constant 0 : index
    %c128 = arith.constant 128 : index
    %4 = vector.load %arg1[%c0_5, %c128] : memref<256x512xf32, #tpu.memory_space<vmem>>, vector<256x128xf32>
    %5 = arith.addf %4, %0 : vector<256x128xf32>
    %c0_6 = arith.constant 0 : index
    %c128_7 = arith.constant 128 : index
    %6 = vector.load %arg3[%c0_6, %c128_7] : memref<256x512xf32, #tpu.memory_space<vmem>>, vector<256x128xf32>
    tpu.vector_store %arg3[%c0_6, %c128_7], %5 {strides = array<i32>} : memref<256x512xf32, #tpu.memory_space<vmem>>, vector<256x128xf32>,
    %c0_8 = arith.constant 0 : index
    %c256 = arith.constant 256 : index
    %7 = vector.load %arg1[%c0_8, %c256] : memref<256x512xf32, #tpu.memory_space<vmem>>, vector<256x128xf32>
    %8 = arith.addf %7, %0 : vector<256x128xf32>
    %c0_9 = arith.constant 0 : index
    %c256_10 = arith.constant 256 : index
    %9 = vector.load %arg3[%c0_9, %c256_10] : memref<256x512xf32, #tpu.memory_space<vmem>>, vector<256x128xf32>
    tpu.vector_store %arg3[%c0_9, %c256_10], %8 {strides = array<i32>} : memref<256x512xf32, #tpu.memory_space<vmem>>, vector<256x128xf32>,
    %c0_11 = arith.constant 0 : index
    %c384 = arith.constant 384 : index
    %10 = vector.load %arg1[%c0_11, %c384] : memref<256x512xf32, #tpu.memory_space<vmem>>, vector<256x128xf32>
    %11 = arith.addf %10, %0 : vector<256x128xf32>
    %c0_12 = arith.constant 0 : index
    %c384_13 = arith.constant 384 : index
    %12 = vector.load %arg3[%c0_12, %c384_13] : memref<256x512xf32, #tpu.memory_space<vmem>>, vector<256x128xf32>
    tpu.vector_store %arg3[%c0_12, %c384_13], %11 {strides = array<i32>} : memref<256x512xf32, #tpu.memory_space<vmem>>, vector<256x128xf32>,
    return
  }
  func.func @transform_0(%arg0: i32) -> (i32, i32) {
    %c0_i32 = arith.constant 0 : i32
    %c0_i32_0 = arith.constant 0 : i32
    return %arg0, %c0_i32 : i32, i32
  }
  func.func @transform_1(%arg0: i32) -> (i32, i32) {
    %c0_i32 = arith.constant 0 : i32
    %c0_i32_0 = arith.constant 0 : i32
    return %arg0, %c0_i32 : i32, i32
  }
  func.func @transform_2(%arg0: i32) -> (i32, i32) {
    %c0_i32 = arith.constant 0 : i32
    %c0_i32_0 = arith.constant 0 : i32
    return %arg0, %c0_i32 : i32, i32
  }
}

</mosaic_0001>

<llo_original>
// kernel: tpu_custom_call.1
$region0: #{tpu_custom_call.1}
  #allocation0 [shape = 'u32[]', space=smem, size = 0x4, offset = 0x4, fixed_abs, tag = 'smem constant byte address 0x4 - core index']
  #allocation1 [shape = 'u32[144,128]{1,0:T(1,128)}', space=vmem, size = 0x12000, scoped, tag = 'internal scratch']
  %s0 = inlined_call_operand.hbm [shape: f32[1024,512], index: 0, kind: input, shape index: {}]
  %s1 = inlined_call_operand.hbm [shape: f32[1024,128], index: 1, kind: input, shape index: {}]
  %s2 = inlined_call_operand.hbm [shape: f32[1024,512], index: 2, kind: output, shape index: {}]
  %s3 = sld [smem:[#allocation0]]
  $region49: #{tpu_custom_call.1} parent=0
    _
  %s5 = ssub.s32 1, %s3
  %s6 = scalar_select 0, %s5, %s3
  $region1: #{tpu_custom_call.1} parent=0
    #allocation2 [shape = 'u8[1048576]{0}', space=vmem, size = 0x100000, scoped, tag = 'input window, operand 0']
    #allocation3 [shape = 's32[2]{0}', space=sflag, size = 0x8, scoped, tag = 'scoped memory for tpu_custom_call.1']
    #allocation4 [shape = 's32[2]{0}', space=sflag, size = 0x8, scoped, tag = 'scoped memory for tpu_custom_call.1']
    #allocation5 [shape = 'u8[262144]{0}', space=vmem, size = 0x40000, scoped, tag = 'input window, operand 1']
    #allocation6 [shape = 's32[2]{0}', space=sflag, size = 0x8, scoped, tag = 'scoped memory for tpu_custom_call.1']
    #allocation7 [shape = 'u8[1048576]{0}', space=vmem, size = 0x100000, scoped, tag = 'output window, operand 0']
    %7 = vsyncpa [#allocation3], 0
    %s8 = scalar_lea.sflag [#allocation3], 1
    %9 = vsyncpa %s8, 0
    %10 = vsyncpa [#allocation6], 0
    %s11 = scalar_lea.sflag [#allocation6], 1
    %12 = vsyncpa %s11, 0
    %13 = vsyncpa [#allocation4], 0
    %s14 = scalar_lea.sflag [#allocation4], 1
    %15 = vsyncpa %s14, 0
    loop: start=0, step=1, limit=6
    $region2: #{tpu_custom_call.1} parent=1 // loop_pre_header
      _
    $region3: #{tpu_custom_call.1} parent=1 // loop_header
      %s17 = sphi 0, %s21
      %p18 = scmp.ge.s32.totalorder %s17, 6
      %s27 = sphi 0, %s29
      %s30 = sphi 0, %s27
      %s31 = sphi 0, %s30
      %s47 = sphi 0, %s31
      %s53 = sphi 0, %s55
      %s56 = sphi 0, %s53
      %s57 = sphi 0, %s56
      %s73 = sphi 0, %s57
      %s79 = sphi 0, %s81
      %s82 = sphi 0, %s79
      %s83 = sphi 0, %s82
      %s99 = sphi 0, %s83
    $region4: #{tpu_custom_call.1} parent=1 // loop_header_branch
      %20 = sbr.rel (%p18) target = $region8
    $region5: #{tpu_custom_call.1} parent=1 // loop_body
      %s22 = ssub.s32 %s17, 1
      %s23 = ssub.s32 %s17, 2
      %s24 = sadd.s32 %s17, 1
      %s25 = ssub.s32 %s17, %s24
      %p26 = scmp.eq.s32.totalorder %s25, 0
      %s28 = sadd.s32 %s27, 1
      %s29 = scalar_select %p26, %s27, %s28
      %p32 = pneg %p26
      %p33 = scmp.eq.s32.totalorder %s17, 3
      %p34 = por %p32, %p33
      %p35 = scmp.ne.s32.totalorder %s27, %s30
      %p36 = scmp.eq.s32.totalorder %s17, 0
      %p37 = por %p35, %p36
      %p38 = scmp.ne.s32.totalorder %s27, %s30
      %p39 = scmp.eq.s32.totalorder %s22, 3
      %p40 = por %p38, %p39
      %p41 = scmp.ne.s32.totalorder %s30, %s31
      %p42 = scmp.eq.s32.totalorder %s22, 0
      %p43 = por %p41, %p42
      %p44 = scmp.ne.s32.totalorder %s30, %s31
      %p45 = scmp.eq.s32.totalorder %s23, 3
      %p46 = por %p44, %p45
      %p48 = scmp.ne.s32.totalorder %s31, %s47
      %p49 = scmp.eq.s32.totalorder %s23, 0
      %p50 = por %p48, %p49
      %s51 = ssub.s32 %s17, %s24
      %p52 = scmp.eq.s32.totalorder %s51, 0
      %s54 = sadd.s32 %s53, 1
      %s55 = scalar_select %p52, %s53, %s54
      %p58 = pneg %p52
      %p59 = scmp.eq.s32.totalorder %s17, 3
      %p60 = por %p58, %p59
      %p61 = scmp.ne.s32.totalorder %s53, %s56
      %p62 = scmp.eq.s32.totalorder %s17, 0
      %p63 = por %p61, %p62
      %p64 = scmp.ne.s32.totalorder %s53, %s56
      %p65 = scmp.eq.s32.totalorder %s22, 3
      %p66 = por %p64, %p65
      %p67 = scmp.ne.s32.totalorder %s56, %s57
      %p68 = scmp.eq.s32.totalorder %s22, 0
      %p69 = por %p67, %p68
      %p70 = scmp.ne.s32.totalorder %s56, %s57
      %p71 = scmp.eq.s32.totalorder %s23, 3
      %p72 = por %p70, %p71
      %p74 = scmp.ne.s32.totalorder %s57, %s73
      %p75 = scmp.eq.s32.totalorder %s23, 0
      %p76 = por %p74, %p75
      %s77 = ssub.s32 %s17, %s24
      %p78 = scmp.eq.s32.totalorder %s77, 0
      %s80 = sadd.s32 %s79, 1
      %s81 = scalar_select %p78, %s79, %s80
      %p84 = pneg %p78
      %p85 = scmp.eq.s32.totalorder %s17, 3
      %p86 = por %p84, %p85
      %p87 = scmp.ne.s32.totalorder %s79, %s82
      %p88 = scmp.eq.s32.totalorder %s17, 0
      %p89 = por %p87, %p88
      %p90 = scmp.ne.s32.totalorder %s79, %s82
      %p91 = scmp.eq.s32.totalorder %s22, 3
      %p92 = por %p90, %p91
      %p93 = scmp.ne.s32.totalorder %s82, %s83
      %p94 = scmp.eq.s32.totalorder %s22, 0
      %p95 = por %p93, %p94
      %p96 = scmp.ne.s32.totalorder %s82, %s83
      %p97 = scmp.eq.s32.totalorder %s23, 3
      %p98 = por %p96, %p97
      %p100 = scmp.ne.s32.totalorder %s83, %s99
      %p101 = scmp.eq.s32.totalorder %s23, 0
      %p102 = por %p100, %p101
      %p103 = scmp.le.s32.totalorder 1, %s17
      %p104 = scmp.lt.s32.totalorder %s17, 5
      %p105 = pnand %p103, %p104
      %p106 = pneg %p105
      // Predicated region
      $region9: #{tpu_custom_call.1} parent=5 // pred_check
        _
      $region10: #{tpu_custom_call.1} parent=5 // pred_check_branch
        %108 = sbr.rel (%p105) target = $region12
      $region11: #{tpu_custom_call.1} parent=5 // pred_region
        %s109 = ssub.s32 %s17, 1
      $region12: #{tpu_custom_call.1} parent=5 // pred_fallthru
        _
      %p110 = scmp.lt.s32.totalorder %s17, 4
      // Predicated region
      $region13: #{tpu_custom_call.1} parent=5 // pred_check
        %p111 = pneg %p110
      $region14: #{tpu_custom_call.1} parent=5 // pred_check_branch
        %113 = sbr.rel (%p111) target = $region16
      $region15: #{tpu_custom_call.1} parent=5 // pred_region
        // Predicated region
        $region17: #{tpu_custom_call.1} parent=15 // pred_check
          %p114 = pneg %p37
        $region18: #{tpu_custom_call.1} parent=15 // pred_check_branch
          %116 = sbr.rel (%p114) target = $region20
        $region19: #{tpu_custom_call.1} parent=15 // pred_region
          %s117 = sand.u32 %s27, 1
          %s118 = scalar_lea.sflag [#allocation3], %s117
          %s119 = sand.u32 %s27, 1
          %s120 = smul.addr %s119, 1024
          %s121 = scalar_lea.vmem [#allocation2], %s120
          %s122 = smul.u32 32, %s17
          %s124 = ssub.s32 16384, 16384
          %125 = vsyncadd %s118, %s124
          %s126 = smul.addr %s122, 4
          %s127 = smul.addr %s126, 128
          %s128 = scalar_lea.hbm %s0, %s127
          %s129 = sshll.u32 %s121, 4
          %s130 = int_to_ptr.vmem [resolvable:$true] %s129
          %135 = dma.hbm_to_vmem [thread:$0]  %s128, 16384, %s130, %s118, 512, 512, 32
        $region20: #{tpu_custom_call.1} parent=15 // pred_fallthru
          _
        // Predicated region
        $region21: #{tpu_custom_call.1} parent=15 // pred_check
          %p136 = pneg %p63
        $region22: #{tpu_custom_call.1} parent=15 // pred_check_branch
          %138 = sbr.rel (%p136) target = $region24
        $region23: #{tpu_custom_call.1} parent=15 // pred_region
          %s139 = sand.u32 %s53, 1
          %s140 = scalar_lea.sflag [#allocation6], %s139
          %s141 = sand.u32 %s53, 1
          %s142 = smul.addr %s141, 256
          %s143 = scalar_lea.vmem [#allocation5], %s142
          %s144 = smul.u32 32, %s17
          %s146 = ssub.s32 4096, 4096
          %147 = vsyncadd %s140, %s146
          %s148 = smul.addr %s144, 128
          %s149 = scalar_lea.hbm %s1, %s148
          %s150 = sshll.u32 %s143, 4
          %s151 = int_to_ptr.vmem [resolvable:$true] %s150
          %156 = dma.hbm_to_vmem [thread:$0]  %s149, 4096, %s151, %s140, 128, 128, 8
        $region24: #{tpu_custom_call.1} parent=15 // pred_fallthru
          _
      $region16: #{tpu_custom_call.1} parent=5 // pred_fallthru
        _
      %p157 = scmp.le.s32.totalorder 1, %s17
      %p158 = scmp.lt.s32.totalorder %s17, 5
      %p159 = pnand %p157, %p158
      %p160 = pneg %p159
      // Predicated region
      $region25: #{tpu_custom_call.1} parent=5 // pred_check
        _
      $region26: #{tpu_custom_call.1} parent=5 // pred_check_branch
        %162 = sbr.rel (%p159) target = $region28
      $region27: #{tpu_custom_call.1} parent=5 // pred_region
        %s163 = ssub.s32 %s17, 1
        %s164 = sand.u32 %s30, 1
        %s165 = scalar_lea.sflag [#allocation3], %s164
        %s166 = sand.u32 %s30, 1
        %s167 = smul.addr %s166, 1024
        %s168 = scalar_lea.vmem [#allocation2], %s167
        // Predicated region
        $region29: #{tpu_custom_call.1} parent=27 // pred_check
          %p169 = pneg %p43
        $region30: #{tpu_custom_call.1} parent=27 // pred_check_branch
          %171 = sbr.rel (%p169) target = $region32
        $region31: #{tpu_custom_call.1} parent=27 // pred_region
          %172 = dma.done %s165, 16384
        $region32: #{tpu_custom_call.1} parent=27 // pred_fallthru
          _
        %s173 = sand.u32 %s56, 1
        %s174 = scalar_lea.sflag [#allocation6], %s173
        %s175 = sand.u32 %s56, 1
        %s176 = smul.addr %s175, 256
        %s177 = scalar_lea.vmem [#allocation5], %s176
        // Predicated region
        $region33: #{tpu_custom_call.1} parent=27 // pred_check
          %p178 = pneg %p69
        $region34: #{tpu_custom_call.1} parent=27 // pred_check_branch
          %180 = sbr.rel (%p178) target = $region36
        $region35: #{tpu_custom_call.1} parent=27 // pred_region
          %181 = dma.done %s174, 4096
        $region36: #{tpu_custom_call.1} parent=27 // pred_fallthru
          _
        %s182 = sand.u32 %s30, 1
        %s183 = scalar_lea.sflag [#allocation3], %s182
        %s184 = sand.u32 %s30, 1
        %s185 = smul.addr %s184, 1024
        %s186 = scalar_lea.vmem [#allocation2], %s185
        %p187 = pneg %p43
        %p188 = pneg %p40
        %s189 = sand.u32 %s56, 1
        %s190 = scalar_lea.sflag [#allocation6], %s189
        %s191 = sand.u32 %s56, 1
        %s192 = smul.addr %s191, 256
        %s193 = scalar_lea.vmem [#allocation5], %s192
        %p194 = pneg %p69
        %p195 = pneg %p66
        %p196 = pneg %p95
        %p197 = pneg %p92
        %s198 = sand.u32 %s82, 1
        %s199 = scalar_lea.sflag [#allocation4], %s198
        %s200 = sand.u32 %s82, 1
        %s201 = smul.addr %s200, 1024
        %s202 = scalar_lea.vmem [#allocation7], %s201
        %s203 = smul.u32 32, %s22
        %s204 = smul.u32 32, %s22
        %s205 = smul.u32 32, %s22
        %v206 = vld [vmem:[%s177] sm:$0xff]
        %v207 = vld [vmem:[%s177 + $0x8] sm:$0xff]
        %v208 = vld [vmem:[%s177 + $0x10] sm:$0xff]
        %v209 = vld [vmem:[%s177 + $0x18] sm:$0xff]
        %v210 = vld [vmem:[%s177 + $0x20] sm:$0xff]
        %v211 = vld [vmem:[%s177 + $0x28] sm:$0xff]
        %v212 = vld [vmem:[%s177 + $0x30] sm:$0xff]
        %v213 = vld [vmem:[%s177 + $0x38] sm:$0xff]
        %v214 = vld [vmem:[%s177 + $0x40] sm:$0xff]
        %v215 = vld [vmem:[%s177 + $0x48] sm:$0xff]
        %v216 = vld [vmem:[%s177 + $0x50] sm:$0xff]
        %v217 = vld [vmem:[%s177 + $0x58] sm:$0xff]
        %v218 = vld [vmem:[%s177 + $0x60] sm:$0xff]
        %v219 = vld [vmem:[%s177 + $0x68] sm:$0xff]
        %v220 = vld [vmem:[%s177 + $0x70] sm:$0xff]
        %v221 = vld [vmem:[%s177 + $0x78] sm:$0xff]
        %v222 = vld [vmem:[%s177 + $0x80] sm:$0xff]
        %v223 = vld [vmem:[%s177 + $0x88] sm:$0xff]
        %v224 = vld [vmem:[%s177 + $0x90] sm:$0xff]
        %v225 = vld [vmem:[%s177 + $0x98] sm:$0xff]
        %v226 = vld [vmem:[%s177 + $0xa0] sm:$0xff]
        %v227 = vld [vmem:[%s177 + $0xa8] sm:$0xff]
        %v228 = vld [vmem:[%s177 + $0xb0] sm:$0xff]
        %v229 = vld [vmem:[%s177 + $0xb8] sm:$0xff]
        %v230 = vld [vmem:[%s177 + $0xc0] sm:$0xff]
        %v231 = vld [vmem:[%s177 + $0xc8] sm:$0xff]
        %v232 = vld [vmem:[%s177 + $0xd0] sm:$0xff]
        %v233 = vld [vmem:[%s177 + $0xd8] sm:$0xff]
        %v234 = vld [vmem:[%s177 + $0xe0] sm:$0xff]
        %v235 = vld [vmem:[%s177 + $0xe8] sm:$0xff]
        %v236 = vld [vmem:[%s177 + $0xf0] sm:$0xff]
        %v237 = vld [vmem:[%s177 + $0xf8] sm:$0xff]
        %v238 = vld [vmem:[%s168] sm:$0xff]
        %v239 = vld [vmem:[%s168 + $0x20] sm:$0xff]
        %v240 = vld [vmem:[%s168 + $0x40] sm:$0xff]
        %v241 = vld [vmem:[%s168 + $0x60] sm:$0xff]
        %v242 = vld [vmem:[%s168 + $0x80] sm:$0xff]
        %v243 = vld [vmem:[%s168 + $0xa0] sm:$0xff]
        %v244 = vld [vmem:[%s168 + $0xc0] sm:$0xff]
        %v245 = vld [vmem:[%s168 + $0xe0] sm:$0xff]
        %v246 = vld [vmem:[%s168 + $0x100] sm:$0xff]
        %v247 = vld [vmem:[%s168 + $0x120] sm:$0xff]
        %v248 = vld [vmem:[%s168 + $0x140] sm:$0xff]
        %v249 = vld [vmem:[%s168 + $0x160] sm:$0xff]
        %v250 = vld [vmem:[%s168 + $0x180] sm:$0xff]
        %v251 = vld [vmem:[%s168 + $0x1a0] sm:$0xff]
        %v252 = vld [vmem:[%s168 + $0x1c0] sm:$0xff]
        %v253 = vld [vmem:[%s168 + $0x1e0] sm:$0xff]
        %v254 = vld [vmem:[%s168 + $0x200] sm:$0xff]
        %v255 = vld [vmem:[%s168 + $0x220] sm:$0xff]
        %v256 = vld [vmem:[%s168 + $0x240] sm:$0xff]
        %v257 = vld [vmem:[%s168 + $0x260] sm:$0xff]
        %v258 = vld [vmem:[%s168 + $0x280] sm:$0xff]
        %v259 = vld [vmem:[%s168 + $0x2a0] sm:$0xff]
        %v260 = vld [vmem:[%s168 + $0x2c0] sm:$0xff]
        %v261 = vld [vmem:[%s168 + $0x2e0] sm:$0xff]
        %v262 = vld [vmem:[%s168 + $0x300] sm:$0xff]
        %v263 = vld [vmem:[%s168 + $0x320] sm:$0xff]
        %v264 = vld [vmem:[%s168 + $0x340] sm:$0xff]
        %v265 = vld [vmem:[%s168 + $0x360] sm:$0xff]
        %v266 = vld [vmem:[%s168 + $0x380] sm:$0xff]
        %v267 = vld [vmem:[%s168 + $0x3a0] sm:$0xff]
        %v268 = vld [vmem:[%s168 + $0x3c0] sm:$0xff]
        %v269 = vld [vmem:[%s168 + $0x3e0] sm:$0xff]
        %v270 = vadd.f32 %v238, %v206
        %v271 = vadd.f32 %v239, %v207
        %v272 = vadd.f32 %v240, %v208
        %v273 = vadd.f32 %v241, %v209
        %v274 = vadd.f32 %v242, %v210
        %v275 = vadd.f32 %v243, %v211
        %v276 = vadd.f32 %v244, %v212
        %v277 = vadd.f32 %v245, %v213
        %v278 = vadd.f32 %v246, %v214
        %v279 = vadd.f32 %v247, %v215
        %v280 = vadd.f32 %v248, %v216
        %v281 = vadd.f32 %v249, %v217
        %v282 = vadd.f32 %v250, %v218
        %v283 = vadd.f32 %v251, %v219
        %v284 = vadd.f32 %v252, %v220
        %v285 = vadd.f32 %v253, %v221
        %v286 = vadd.f32 %v254, %v222
        %v287 = vadd.f32 %v255, %v223
        %v288 = vadd.f32 %v256, %v224
        %v289 = vadd.f32 %v257, %v225
        %v290 = vadd.f32 %v258, %v226
        %v291 = vadd.f32 %v259, %v227
        %v292 = vadd.f32 %v260, %v228
        %v293 = vadd.f32 %v261, %v229
        %v294 = vadd.f32 %v262, %v230
        %v295 = vadd.f32 %v263, %v231
        %v296 = vadd.f32 %v264, %v232
        %v297 = vadd.f32 %v265, %v233
        %v298 = vadd.f32 %v266, %v234
        %v299 = vadd.f32 %v267, %v235
        %v300 = vadd.f32 %v268, %v236
        %v301 = vadd.f32 %v269, %v237
        %302 = vst [vmem:[%s202] sm:$0xff] %v270
        %303 = vst [vmem:[%s202 + $0x20] sm:$0xff] %v271
        %304 = vst [vmem:[%s202 + $0x40] sm:$0xff] %v272
        %305 = vst [vmem:[%s202 + $0x60] sm:$0xff] %v273
        %306 = vst [vmem:[%s202 + $0x80] sm:$0xff] %v274
        %307 = vst [vmem:[%s202 + $0xa0] sm:$0xff] %v275
        %308 = vst [vmem:[%s202 + $0xc0] sm:$0xff] %v276
        %309 = vst [vmem:[%s202 + $0xe0] sm:$0xff] %v277
        %310 = vst [vmem:[%s202 + $0x100] sm:$0xff] %v278
        %311 = vst [vmem:[%s202 + $0x120] sm:$0xff] %v279
        %312 = vst [vmem:[%s202 + $0x140] sm:$0xff] %v280
        %313 = vst [vmem:[%s202 + $0x160] sm:$0xff] %v281
        %314 = vst [vmem:[%s202 + $0x180] sm:$0xff] %v282
        %315 = vst [vmem:[%s202 + $0x1a0] sm:$0xff] %v283
        %316 = vst [vmem:[%s202 + $0x1c0] sm:$0xff] %v284
        %317 = vst [vmem:[%s202 + $0x1e0] sm:$0xff] %v285
        %318 = vst [vmem:[%s202 + $0x200] sm:$0xff] %v286
        %319 = vst [vmem:[%s202 + $0x220] sm:$0xff] %v287
        %320 = vst [vmem:[%s202 + $0x240] sm:$0xff] %v288
        %321 = vst [vmem:[%s202 + $0x260] sm:$0xff] %v289
        %322 = vst [vmem:[%s202 + $0x280] sm:$0xff] %v290
        %323 = vst [vmem:[%s202 + $0x2a0] sm:$0xff] %v291
        %324 = vst [vmem:[%s202 + $0x2c0] sm:$0xff] %v292
        %325 = vst [vmem:[%s202 + $0x2e0] sm:$0xff] %v293
        %326 = vst [vmem:[%s202 + $0x300] sm:$0xff] %v294
        %327 = vst [vmem:[%s202 + $0x320] sm:$0xff] %v295
        %328 = vst [vmem:[%s202 + $0x340] sm:$0xff] %v296
        %329 = vst [vmem:[%s202 + $0x360] sm:$0xff] %v297
        %330 = vst [vmem:[%s202 + $0x380] sm:$0xff] %v298
        %331 = vst [vmem:[%s202 + $0x3a0] sm:$0xff] %v299
        %332 = vst [vmem:[%s202 + $0x3c0] sm:$0xff] %v300
        %333 = vst [vmem:[%s202 + $0x3e0] sm:$0xff] %v301
        %v334 = vld [vmem:[%s168 + $0x8] sm:$0xff]
        %v335 = vld [vmem:[%s168 + $0x28] sm:$0xff]
        %v336 = vld [vmem:[%s168 + $0x48] sm:$0xff]
        %v337 = vld [vmem:[%s168 + $0x68] sm:$0xff]
        %v338 = vld [vmem:[%s168 + $0x88] sm:$0xff]
        %v339 = vld [vmem:[%s168 + $0xa8] sm:$0xff]
        %v340 = vld [vmem:[%s168 + $0xc8] sm:$0xff]
        %v341 = vld [vmem:[%s168 + $0xe8] sm:$0xff]
        %v342 = vld [vmem:[%s168 + $0x108] sm:$0xff]
        %v343 = vld [vmem:[%s168 + $0x128] sm:$0xff]
        %v344 = vld [vmem:[%s168 + $0x148] sm:$0xff]
        %v345 = vld [vmem:[%s168 + $0x168] sm:$0xff]
        %v346 = vld [vmem:[%s168 + $0x188] sm:$0xff]
        %v347 = vld [vmem:[%s168 + $0x1a8] sm:$0xff]
        %v348 = vld [vmem:[%s168 + $0x1c8] sm:$0xff]
        %v349 = vld [vmem:[%s168 + $0x1e8] sm:$0xff]
        %v350 = vld [vmem:[%s168 + $0x208] sm:$0xff]
        %v351 = vld [vmem:[%s168 + $0x228] sm:$0xff]
        %v352 = vld [vmem:[%s168 + $0x248] sm:$0xff]
        %v353 = vld [vmem:[%s168 + $0x268] sm:$0xff]
        %v354 = vld [vmem:[%s168 + $0x288] sm:$0xff]
        %v355 = vld [vmem:[%s168 + $0x2a8] sm:$0xff]
        %v356 = vld [vmem:[%s168 + $0x2c8] sm:$0xff]
        %v357 = vld [vmem:[%s168 + $0x2e8] sm:$0xff]
        %v358 = vld [vmem:[%s168 + $0x308] sm:$0xff]
        %v359 = vld [vmem:[%s168 + $0x328] sm:$0xff]
        %v360 = vld [vmem:[%s168 + $0x348] sm:$0xff]
        %v361 = vld [vmem:[%s168 + $0x368] sm:$0xff]
        %v362 = vld [vmem:[%s168 + $0x388] sm:$0xff]
        %v363 = vld [vmem:[%s168 + $0x3a8] sm:$0xff]
        %v364 = vld [vmem:[%s168 + $0x3c8] sm:$0xff]
        %v365 = vld [vmem:[%s168 + $0x3e8] sm:$0xff]
        %v366 = vadd.f32 %v334, %v206
        %v367 = vadd.f32 %v335, %v207
        %v368 = vadd.f32 %v336, %v208
        %v369 = vadd.f32 %v337, %v209
        %v370 = vadd.f32 %v338, %v210
        %v371 = vadd.f32 %v339, %v211
        %v372 = vadd.f32 %v340, %v212
        %v373 = vadd.f32 %v341, %v213
        %v374 = vadd.f32 %v342, %v214
        %v375 = vadd.f32 %v343, %v215
        %v376 = vadd.f32 %v344, %v216
        %v377 = vadd.f32 %v345, %v217
        %v378 = vadd.f32 %v346, %v218
        %v379 = vadd.f32 %v347, %v219
        %v380 = vadd.f32 %v348, %v220
        %v381 = vadd.f32 %v349, %v221
        %v382 = vadd.f32 %v350, %v222
        %v383 = vadd.f32 %v351, %v223
        %v384 = vadd.f32 %v352, %v224
        %v385 = vadd.f32 %v353, %v225
        %v386 = vadd.f32 %v354, %v226
        %v387 = vadd.f32 %v355, %v227
        %v388 = vadd.f32 %v356, %v228
        %v389 = vadd.f32 %v357, %v229
        %v390 = vadd.f32 %v358, %v230
        %v391 = vadd.f32 %v359, %v231
        %v392 = vadd.f32 %v360, %v232
        %v393 = vadd.f32 %v361, %v233
        %v394 = vadd.f32 %v362, %v234
        %v395 = vadd.f32 %v363, %v235
        %v396 = vadd.f32 %v364, %v236
        %v397 = vadd.f32 %v365, %v237
        %398 = vst [vmem:[%s202 + $0x8] sm:$0xff] %v366
        %399 = vst [vmem:[%s202 + $0x28] sm:$0xff] %v367
        %400 = vst [vmem:[%s202 + $0x48] sm:$0xff] %v368
        %401 = vst [vmem:[%s202 + $0x68] sm:$0xff] %v369
        %402 = vst [vmem:[%s202 + $0x88] sm:$0xff] %v370
        %403 = vst [vmem:[%s202 + $0xa8] sm:$0xff] %v371
        %404 = vst [vmem:[%s202 + $0xc8] sm:$0xff] %v372
        %405 = vst [vmem:[%s202 + $0xe8] sm:$0xff] %v373
        %406 = vst [vmem:[%s202 + $0x108] sm:$0xff] %v374
        %407 = vst [vmem:[%s202 + $0x128] sm:$0xff] %v375
        %408 = vst [vmem:[%s202 + $0x148] sm:$0xff] %v376
        %409 = vst [vmem:[%s202 + $0x168] sm:$0xff] %v377
        %410 = vst [vmem:[%s202 + $0x188] sm:$0xff] %v378
        %411 = vst [vmem:[%s202 + $0x1a8] sm:$0xff] %v379
        %412 = vst [vmem:[%s202 + $0x1c8] sm:$0xff] %v380
        %413 = vst [vmem:[%s202 + $0x1e8] sm:$0xff] %v381
        %414 = vst [vmem:[%s202 + $0x208] sm:$0xff] %v382
        %415 = vst [vmem:[%s202 + $0x228] sm:$0xff] %v383
        %416 = vst [vmem:[%s202 + $0x248] sm:$0xff] %v384
        %417 = vst [vmem:[%s202 + $0x268] sm:$0xff] %v385
        %418 = vst [vmem:[%s202 + $0x288] sm:$0xff] %v386
        %419 = vst [vmem:[%s202 + $0x2a8] sm:$0xff] %v387
        %420 = vst [vmem:[%s202 + $0x2c8] sm:$0xff] %v388
        %421 = vst [vmem:[%s202 + $0x2e8] sm:$0xff] %v389
        %422 = vst [vmem:[%s202 + $0x308] sm:$0xff] %v390
        %423 = vst [vmem:[%s202 + $0x328] sm:$0xff] %v391
        %424 = vst [vmem:[%s202 + $0x348] sm:$0xff] %v392
        %425 = vst [vmem:[%s202 + $0x368] sm:$0xff] %v393
        %426 = vst [vmem:[%s202 + $0x388] sm:$0xff] %v394
        %427 = vst [vmem:[%s202 + $0x3a8] sm:$0xff] %v395
        %428 = vst [vmem:[%s202 + $0x3c8] sm:$0xff] %v396
        %429 = vst [vmem:[%s202 + $0x3e8] sm:$0xff] %v397
        %v430 = vld [vmem:[%s168 + $0x10] sm:$0xff]
        %v431 = vld [vmem:[%s168 + $0x30] sm:$0xff]
        %v432 = vld [vmem:[%s168 + $0x50] sm:$0xff]
        %v433 = vld [vmem:[%s168 + $0x70] sm:$0xff]
        %v434 = vld [vmem:[%s168 + $0x90] sm:$0xff]
        %v435 = vld [vmem:[%s168 + $0xb0] sm:$0xff]
        %v436 = vld [vmem:[%s168 + $0xd0] sm:$0xff]
        %v437 = vld [vmem:[%s168 + $0xf0] sm:$0xff]
        %v438 = vld [vmem:[%s168 + $0x110] sm:$0xff]
        %v439 = vld [vmem:[%s168 + $0x130] sm:$0xff]
        %v440 = vld [vmem:[%s168 + $0x150] sm:$0xff]
        %v441 = vld [vmem:[%s168 + $0x170] sm:$0xff]
        %v442 = vld [vmem:[%s168 + $0x190] sm:$0xff]
        %v443 = vld [vmem:[%s168 + $0x1b0] sm:$0xff]
        %v444 = vld [vmem:[%s168 + $0x1d0] sm:$0xff]
        %v445 = vld [vmem:[%s168 + $0x1f0] sm:$0xff]
        %v446 = vld [vmem:[%s168 + $0x210] sm:$0xff]
        %v447 = vld [vmem:[%s168 + $0x230] sm:$0xff]
        %v448 = vld [vmem:[%s168 + $0x250] sm:$0xff]
        %v449 = vld [vmem:[%s168 + $0x270] sm:$0xff]
        %v450 = vld [vmem:[%s168 + $0x290] sm:$0xff]
        %v451 = vld [vmem:[%s168 + $0x2b0] sm:$0xff]
        %v452 = vld [vmem:[%s168 + $0x2d0] sm:$0xff]
        %v453 = vld [vmem:[%s168 + $0x2f0] sm:$0xff]
        %v454 = vld [vmem:[%s168 + $0x310] sm:$0xff]
        %v455 = vld [vmem:[%s168 + $0x330] sm:$0xff]
        %v456 = vld [vmem:[%s168 + $0x350] sm:$0xff]
        %v457 = vld [vmem:[%s168 + $0x370] sm:$0xff]
        %v458 = vld [vmem:[%s168 + $0x390] sm:$0xff]
        %v459 = vld [vmem:[%s168 + $0x3b0] sm:$0xff]
        %v460 = vld [vmem:[%s168 + $0x3d0] sm:$0xff]
        %v461 = vld [vmem:[%s168 + $0x3f0] sm:$0xff]
        %v462 = vadd.f32 %v430, %v206
        %v463 = vadd.f32 %v431, %v207
        %v464 = vadd.f32 %v432, %v208
        %v465 = vadd.f32 %v433, %v209
        %v466 = vadd.f32 %v434, %v210
        %v467 = vadd.f32 %v435, %v211
        %v468 = vadd.f32 %v436, %v212
        %v469 = vadd.f32 %v437, %v213
        %v470 = vadd.f32 %v438, %v214
        %v471 = vadd.f32 %v439, %v215
        %v472 = vadd.f32 %v440, %v216
        %v473 = vadd.f32 %v441, %v217
        %v474 = vadd.f32 %v442, %v218
        %v475 = vadd.f32 %v443, %v219
        %v476 = vadd.f32 %v444, %v220
        %v477 = vadd.f32 %v445, %v221
        %v478 = vadd.f32 %v446, %v222
        %v479 = vadd.f32 %v447, %v223
        %v480 = vadd.f32 %v448, %v224
        %v481 = vadd.f32 %v449, %v225
        %v482 = vadd.f32 %v450, %v226
        %v483 = vadd.f32 %v451, %v227
        %v484 = vadd.f32 %v452, %v228
        %v485 = vadd.f32 %v453, %v229
        %v486 = vadd.f32 %v454, %v230
        %v487 = vadd.f32 %v455, %v231
        %v488 = vadd.f32 %v456, %v232
        %v489 = vadd.f32 %v457, %v233
        %v490 = vadd.f32 %v458, %v234
        %v491 = vadd.f32 %v459, %v235
        %v492 = vadd.f32 %v460, %v236
        %v493 = vadd.f32 %v461, %v237
        %494 = vst [vmem:[%s202 + $0x10] sm:$0xff] %v462
        %495 = vst [vmem:[%s202 + $0x30] sm:$0xff] %v463
        %496 = vst [vmem:[%s202 + $0x50] sm:$0xff] %v464
        %497 = vst [vmem:[%s202 + $0x70] sm:$0xff] %v465
        %498 = vst [vmem:[%s202 + $0x90] sm:$0xff] %v466
        %499 = vst [vmem:[%s202 + $0xb0] sm:$0xff] %v467
        %500 = vst [vmem:[%s202 + $0xd0] sm:$0xff] %v468
        %501 = vst [vmem:[%s202 + $0xf0] sm:$0xff] %v469
        %502 = vst [vmem:[%s202 + $0x110] sm:$0xff] %v470
        %503 = vst [vmem:[%s202 + $0x130] sm:$0xff] %v471
        %504 = vst [vmem:[%s202 + $0x150] sm:$0xff] %v472
        %505 = vst [vmem:[%s202 + $0x170] sm:$0xff] %v473
        %506 = vst [vmem:[%s202 + $0x190] sm:$0xff] %v474
        %507 = vst [vmem:[%s202 + $0x1b0] sm:$0xff] %v475
        %508 = vst [vmem:[%s202 + $0x1d0] sm:$0xff] %v476
        %509 = vst [vmem:[%s202 + $0x1f0] sm:$0xff] %v477
        %510 = vst [vmem:[%s202 + $0x210] sm:$0xff] %v478
        %511 = vst [vmem:[%s202 + $0x230] sm:$0xff] %v479
        %512 = vst [vmem:[%s202 + $0x250] sm:$0xff] %v480
        %513 = vst [vmem:[%s202 + $0x270] sm:$0xff] %v481
        %514 = vst [vmem:[%s202 + $0x290] sm:$0xff] %v482
        %515 = vst [vmem:[%s202 + $0x2b0] sm:$0xff] %v483
        %516 = vst [vmem:[%s202 + $0x2d0] sm:$0xff] %v484
        %517 = vst [vmem:[%s202 + $0x2f0] sm:$0xff] %v485
        %518 = vst [vmem:[%s202 + $0x310] sm:$0xff] %v486
        %519 = vst [vmem:[%s202 + $0x330] sm:$0xff] %v487
        %520 = vst [vmem:[%s202 + $0x350] sm:$0xff] %v488
        %521 = vst [vmem:[%s202 + $0x370] sm:$0xff] %v489
        %522 = vst [vmem:[%s202 + $0x390] sm:$0xff] %v490
        %523 = vst [vmem:[%s202 + $0x3b0] sm:$0xff] %v491
        %524 = vst [vmem:[%s202 + $0x3d0] sm:$0xff] %v492
        %525 = vst [vmem:[%s202 + $0x3f0] sm:$0xff] %v493
        %v526 = vld [vmem:[%s168 + $0x18] sm:$0xff]
        %v527 = vld [vmem:[%s168 + $0x38] sm:$0xff]
        %v528 = vld [vmem:[%s168 + $0x58] sm:$0xff]
        %v529 = vld [vmem:[%s168 + $0x78] sm:$0xff]
        %v530 = vld [vmem:[%s168 + $0x98] sm:$0xff]
        %v531 = vld [vmem:[%s168 + $0xb8] sm:$0xff]
        %v532 = vld [vmem:[%s168 + $0xd8] sm:$0xff]
        %v533 = vld [vmem:[%s168 + $0xf8] sm:$0xff]
        %v534 = vld [vmem:[%s168 + $0x118] sm:$0xff]
        %v535 = vld [vmem:[%s168 + $0x138] sm:$0xff]
        %v536 = vld [vmem:[%s168 + $0x158] sm:$0xff]
        %v537 = vld [vmem:[%s168 + $0x178] sm:$0xff]
        %v538 = vld [vmem:[%s168 + $0x198] sm:$0xff]
        %v539 = vld [vmem:[%s168 + $0x1b8] sm:$0xff]
        %v540 = vld [vmem:[%s168 + $0x1d8] sm:$0xff]
        %v541 = vld [vmem:[%s168 + $0x1f8] sm:$0xff]
        %v542 = vld [vmem:[%s168 + $0x218] sm:$0xff]
        %v543 = vld [vmem:[%s168 + $0x238] sm:$0xff]
        %v544 = vld [vmem:[%s168 + $0x258] sm:$0xff]
        %v545 = vld [vmem:[%s168 + $0x278] sm:$0xff]
        %v546 = vld [vmem:[%s168 + $0x298] sm:$0xff]
        %v547 = vld [vmem:[%s168 + $0x2b8] sm:$0xff]
        %v548 = vld [vmem:[%s168 + $0x2d8] sm:$0xff]
        %v549 = vld [vmem:[%s168 + $0x2f8] sm:$0xff]
        %v550 = vld [vmem:[%s168 + $0x318] sm:$0xff]
        %v551 = vld [vmem:[%s168 + $0x338] sm:$0xff]
        %v552 = vld [vmem:[%s168 + $0x358] sm:$0xff]
        %v553 = vld [vmem:[%s168 + $0x378] sm:$0xff]
        %v554 = vld [vmem:[%s168 + $0x398] sm:$0xff]
        %v555 = vld [vmem:[%s168 + $0x3b8] sm:$0xff]
        %v556 = vld [vmem:[%s168 + $0x3d8] sm:$0xff]
        %v557 = vld [vmem:[%s168 + $0x3f8] sm:$0xff]
        %v558 = vadd.f32 %v526, %v206
        %v559 = vadd.f32 %v527, %v207
        %v560 = vadd.f32 %v528, %v208
        %v561 = vadd.f32 %v529, %v209
        %v562 = vadd.f32 %v530, %v210
        %v563 = vadd.f32 %v531, %v211
        %v564 = vadd.f32 %v532, %v212
        %v565 = vadd.f32 %v533, %v213
        %v566 = vadd.f32 %v534, %v214
        %v567 = vadd.f32 %v535, %v215
        %v568 = vadd.f32 %v536, %v216
        %v569 = vadd.f32 %v537, %v217
        %v570 = vadd.f32 %v538, %v218
        %v571 = vadd.f32 %v539, %v219
        %v572 = vadd.f32 %v540, %v220
        %v573 = vadd.f32 %v541, %v221
        %v574 = vadd.f32 %v542, %v222
        %v575 = vadd.f32 %v543, %v223
        %v576 = vadd.f32 %v544, %v224
        %v577 = vadd.f32 %v545, %v225
        %v578 = vadd.f32 %v546, %v226
        %v579 = vadd.f32 %v547, %v227
        %v580 = vadd.f32 %v548, %v228
        %v581 = vadd.f32 %v549, %v229
        %v582 = vadd.f32 %v550, %v230
        %v583 = vadd.f32 %v551, %v231
        %v584 = vadd.f32 %v552, %v232
        %v585 = vadd.f32 %v553, %v233
        %v586 = vadd.f32 %v554, %v234
        %v587 = vadd.f32 %v555, %v235
        %v588 = vadd.f32 %v556, %v236
        %v589 = vadd.f32 %v557, %v237
        %590 = vst [vmem:[%s202 + $0x18] sm:$0xff] %v558
        %591 = vst [vmem:[%s202 + $0x38] sm:$0xff] %v559
        %592 = vst [vmem:[%s202 + $0x58] sm:$0xff] %v560
        %593 = vst [vmem:[%s202 + $0x78] sm:$0xff] %v561
        %594 = vst [vmem:[%s202 + $0x98] sm:$0xff] %v562
        %595 = vst [vmem:[%s202 + $0xb8] sm:$0xff] %v563
        %596 = vst [vmem:[%s202 + $0xd8] sm:$0xff] %v564
        %597 = vst [vmem:[%s202 + $0xf8] sm:$0xff] %v565
        %598 = vst [vmem:[%s202 + $0x118] sm:$0xff] %v566
        %599 = vst [vmem:[%s202 + $0x138] sm:$0xff] %v567
        %600 = vst [vmem:[%s202 + $0x158] sm:$0xff] %v568
        %601 = vst [vmem:[%s202 + $0x178] sm:$0xff] %v569
        %602 = vst [vmem:[%s202 + $0x198] sm:$0xff] %v570
        %603 = vst [vmem:[%s202 + $0x1b8] sm:$0xff] %v571
        %604 = vst [vmem:[%s202 + $0x1d8] sm:$0xff] %v572
        %605 = vst [vmem:[%s202 + $0x1f8] sm:$0xff] %v573
        %606 = vst [vmem:[%s202 + $0x218] sm:$0xff] %v574
        %607 = vst [vmem:[%s202 + $0x238] sm:$0xff] %v575
        %608 = vst [vmem:[%s202 + $0x258] sm:$0xff] %v576
        %609 = vst [vmem:[%s202 + $0x278] sm:$0xff] %v577
        %610 = vst [vmem:[%s202 + $0x298] sm:$0xff] %v578
        %611 = vst [vmem:[%s202 + $0x2b8] sm:$0xff] %v579
        %612 = vst [vmem:[%s202 + $0x2d8] sm:$0xff] %v580
        %613 = vst [vmem:[%s202 + $0x2f8] sm:$0xff] %v581
        %614 = vst [vmem:[%s202 + $0x318] sm:$0xff] %v582
        %615 = vst [vmem:[%s202 + $0x338] sm:$0xff] %v583
        %616 = vst [vmem:[%s202 + $0x358] sm:$0xff] %v584
        %617 = vst [vmem:[%s202 + $0x378] sm:$0xff] %v585
        %618 = vst [vmem:[%s202 + $0x398] sm:$0xff] %v586
        %619 = vst [vmem:[%s202 + $0x3b8] sm:$0xff] %v587
        %620 = vst [vmem:[%s202 + $0x3d8] sm:$0xff] %v588
        %621 = vst [vmem:[%s202 + $0x3f8] sm:$0xff] %v589
        %s622 = sand.u32 %s82, 1
        %s623 = scalar_lea.sflag [#allocation4], %s622
        %s624 = sand.u32 %s82, 1
        %s625 = smul.addr %s624, 1024
        %s626 = scalar_lea.vmem [#allocation7], %s625
        // Predicated region
        $region37: #{tpu_custom_call.1} parent=27 // pred_check
          %p627 = pneg %p92
        $region38: #{tpu_custom_call.1} parent=27 // pred_check_branch
          %629 = sbr.rel (%p627) target = $region40
        $region39: #{tpu_custom_call.1} parent=27 // pred_region
          %s630 = smul.u32 32, %s22
          %s632 = ssub.s32 16384, 16384
          %633 = vsyncadd %s623, %s632
          %s634 = smul.addr %s630, 4
          %s635 = smul.addr %s634, 128
          %s636 = scalar_lea.hbm %s2, %s635
          %s637 = sshll.u32 %s626, 4
          %s638 = int_to_ptr.vmem [resolvable:$true] %s637
          %643 = dma.vmem_to_hbm [thread:$0]  %s638, 16384, %s636, %s623, 512, 512, 32
        $region40: #{tpu_custom_call.1} parent=27 // pred_fallthru
          _
      $region28: #{tpu_custom_call.1} parent=5 // pred_fallthru
        _
      %p644 = scmp.le.s32.totalorder 2, %s17
      // Predicated region
      $region41: #{tpu_custom_call.1} parent=5 // pred_check
        %p645 = pneg %p644
      $region42: #{tpu_custom_call.1} parent=5 // pred_check_branch
        %647 = sbr.rel (%p645) target = $region44
      $region43: #{tpu_custom_call.1} parent=5 // pred_region
        %s648 = ssub.s32 %s17, 2
        // Predicated region
        $region45: #{tpu_custom_call.1} parent=43 // pred_check
          %p649 = pneg %p98
        $region46: #{tpu_custom_call.1} parent=43 // pred_check_branch
          %651 = sbr.rel (%p649) target = $region48
        $region47: #{tpu_custom_call.1} parent=43 // pred_region
          %s652 = sand.u32 %s83, 1
          %s653 = scalar_lea.sflag [#allocation4], %s652
          %s654 = sand.u32 %s83, 1
          %s655 = smul.addr %s654, 1024
          %s656 = scalar_lea.vmem [#allocation7], %s655
          %657 = dma.done %s653, 16384
        $region48: #{tpu_custom_call.1} parent=43 // pred_fallthru
          _
      $region44: #{tpu_custom_call.1} parent=5 // pred_fallthru
        _
    $region6: #{tpu_custom_call.1} parent=1 // loop_footer
      %s21 = sadd.s32 1, %s17
    $region7: #{tpu_custom_call.1} parent=1 // loop_footer_branch
      %16 = sbr.rel target = $region3
    $region8: #{tpu_custom_call.1} parent=1 // loop_exit
      _
    %658 = vsyncpa [#allocation3], 1
    %s659 = scalar_lea.sflag [#allocation3], 1
    %660 = vsyncpa %s659, 1
    %661 = vsyncpa [#allocation6], 1
    %s662 = scalar_lea.sflag [#allocation6], 1
    %663 = vsyncpa %s662, 1
    %664 = vsyncpa [#allocation4], 1
    %s665 = scalar_lea.sflag [#allocation4], 1
    %666 = vsyncpa %s665, 1

</llo_original>
